<compile_context>
chip_gen: v7x
topology: tpu7x:2x2x1
jax: 0.10.0
libtpu: 0.0.40
codegen_flags: <defaults>
</compile_context>

<pallas_src>
import numpy as np
import jax
import jax.numpy as jnp
from jax.experimental import pallas as pl
from jax.experimental.pallas import tpu as pltpu

BN_EPS = 1e-5

_LANE = 128        # lane width
_T_CAP = 4096      # max lane tile (review: 1024-4096 is the sweet spot)


# ----------------------------------------------------------------------------
# Fused kernel: W_g(g) + W_x(x) -> ReLU -> att conv -> sigmoid -> x * att
#   g_ref   : (F_l, t_hw)  f32     x_ref  : (F_g, t_hw) f32
#   wgt_ref : (F_int, F_l) bf16    wxt_ref: (F_int, F_g) bf16
#   bias_ref/wa_ref : (F_int, 1) f32       ba_ref : (1,) f32 in SMEM
#   o_ref   : (F_g, t_hw)  f32
# ----------------------------------------------------------------------------
def _attention_block_kernel(g_ref, x_ref, wgt_ref, wxt_ref, bias_ref, wa_ref,
                            ba_ref, o_ref):
    x_f32 = x_ref[...]                                     # kept f32 for gating

    # Two 1x1 convs as MXU matmuls: bf16 operands, f32 accumulation.
    g1 = jnp.dot(wgt_ref[...], g_ref[...].astype(jnp.bfloat16),
                 preferred_element_type=jnp.float32)       # (F_int, t)
    x1 = jnp.dot(wxt_ref[...], x_f32.astype(jnp.bfloat16),
                 preferred_element_type=jnp.float32)       # (F_int, t)

    # ReLU(g1 + x1 + folded_bias)   (VPU; bias broadcasts over lanes)
    psi = jnp.maximum(g1 + x1 + bias_ref[...], 0.0)

    # Cout=1 1x1 conv as a sublane reduce over F_int (VPU mul + XLU reduce).
    logit = jnp.sum(psi * wa_ref[...], axis=0, keepdims=True) + ba_ref[0]
    att = jax.nn.sigmoid(logit)                            # (1, t)  EUP

    # out = x * att  (att broadcast over the channel/sublane axis).
    o_ref[...] = (x_f32 * att).astype(o_ref.dtype)


# ----------------------------------------------------------------------------
# Tile selection (trace-time, Python ints only)
# ----------------------------------------------------------------------------
def _stream_vmem_budget_bytes():
    """Budget for the double-buffered streamed blocks, derived from the device
    (v7x has 64 MiB physical VMEM vs 128 MiB on v5e/v6e)."""
    try:
        cap = pltpu.get_tpu_info().vmem_capacity_bytes
    except Exception:
        cap = 64 << 20            # conservative fallback (v7x physical size)
    return max(4 << 20, min(12 << 20, cap // 6))


def _pick_t_hw(HW, N, per_col_bytes):
    """Largest lane tile that (a) is a multiple of 128 and divides HW (or is HW
    itself), (b) fits the double-buffered VMEM budget, (c) keeps >=2 grid
    blocks when possible so both v7x TensorCores get work."""
    budget = _stream_vmem_budget_bytes()
    max_by_vmem = max(_LANE, budget // (2 * per_col_bytes))
    cap = min(HW, _T_CAP, max_by_vmem)

    cands = [t for t in range(_LANE, cap + 1, _LANE) if HW % t == 0]
    if HW <= cap:
        cands.append(HW)          # full-extent block is always legal
    if not cands:
        # No multiple-of-128 divisor of HW fits: fall back to full rows.
        return HW

    with_two_blocks = [t for t in cands if N * (HW // t) >= 2]
    return max(with_two_blocks) if with_two_blocks else max(cands)


# ----------------------------------------------------------------------------
# Parameter construction / BatchNorm folding (done once, outside the hot path)
# ----------------------------------------------------------------------------
def init_params(key, F_g, F_l, F_int):
    """Raw f32 parameters, PyTorch-Conv2d-style uniform init."""
    ks = jax.random.split(key, 6)

    def u(k, shape, fan_in):
        bound = 1.0 / np.sqrt(fan_in)
        return jax.random.uniform(k, shape, jnp.float32, -bound, bound)

    return {
        "wg": u(ks[0], (F_l, F_int), F_l),   # W_g: Conv2d(F_l -> F_int)
        "bg": u(ks[1], (F_int,), F_l),
        "wx": u(ks[2], (F_g, F_int), F_g),   # W_x: Conv2d(F_g -> F_int)
        "bx": u(ks[3], (F_int,), F_g),
        "wa": u(ks[4], (F_int,), F_int),     # att: Conv2d(F_int -> 1)
        "ba": u(ks[5], (1,), F_int),
    }


def fold_bn(params):
    """Fold eval-mode BatchNorm (mean=0, var=1, gamma=1, beta=0) into the convs
    and lay the weights out for the kernel (transposed, matmul ones in bf16)."""
    s = np.float32(1.0 / np.sqrt(1.0 + BN_EPS))
    F_int = params["wg"].shape[1]
    return {
        "wg_t": (params["wg"] * s).T.astype(jnp.bfloat16),                  # (F_int, F_l)
        "wx_t": (params["wx"] * s).T.astype(jnp.bfloat16),                  # (F_int, F_g)
        "bias": ((params["bg"] + params["bx"]) * s)
                .reshape(F_int, 1).astype(jnp.float32),                     # (F_int, 1)
        "wa": (params["wa"] * s).reshape(F_int, 1).astype(jnp.float32),     # (F_int, 1)
        "ba": (params["ba"] * s).reshape(1,).astype(jnp.float32),           # (1,) SMEM
    }


# ----------------------------------------------------------------------------
# Public forward (NCHW in / NCHW out, like the PyTorch module)
# ----------------------------------------------------------------------------
@jax.jit
def attention_block(g, x, folded):
    N, F_l, H, W = g.shape
    _, F_g, _, _ = x.shape
    F_int = folded["wg_t"].shape[0]
    HW = H * W

    # Zero-cost relayout: channels -> sublanes, pixels -> lanes.
    g3 = g.reshape(N, F_l, HW)
    x3 = x.reshape(N, F_g, HW)

    # Streamed f32 bytes per lane column: g-in + x-in + out.
    per_col_bytes = (F_l + 2 * F_g) * 4
    t_hw = _pick_t_hw(HW, N, per_col_bytes)

    out = pl.pallas_call(
        _attention_block_kernel,
        out_shape=jax.ShapeDtypeStruct((N, F_g, HW), x.dtype),
        grid_spec=pltpu.PrefetchScalarGridSpec(
            num_scalar_prefetch=0,
            grid=(N, HW // t_hw),
            in_specs=[
                pl.BlockSpec((None, F_l, t_hw), lambda n, j: (n, 0, j)),  # g rows
                pl.BlockSpec((None, F_g, t_hw), lambda n, j: (n, 0, j)),  # x rows
                pl.BlockSpec((F_int, F_l), lambda n, j: (0, 0)),          # W_g^T bf16
                pl.BlockSpec((F_int, F_g), lambda n, j: (0, 0)),          # W_x^T bf16
                pl.BlockSpec((F_int, 1), lambda n, j: (0, 0)),            # folded bias
                pl.BlockSpec((F_int, 1), lambda n, j: (0, 0)),            # att weight col
                pl.BlockSpec(memory_space=pltpu.MemorySpace.SMEM),        # att bias (scalar)
            ],
            out_specs=pl.BlockSpec((None, F_g, t_hw), lambda n, j: (n, 0, j)),
        ),
        compiler_params=pltpu.CompilerParams(
            dimension_semantics=("parallel", "parallel"),
            vmem_limit_bytes=32 * 1024 * 1024),
    )(g3, x3, folded["wg_t"], folded["wx_t"], folded["bias"],
      folded["wa"], folded["ba"])

    return out.reshape(N, F_g, H, W)


# ----------------------------------------------------------------------------
# Pure-JAX f32 reference (mirrors the PyTorch module, eval-mode BN)
# ----------------------------------------------------------------------------
def attention_block_ref(g, x, params):
    s = 1.0 / np.sqrt(1.0 + BN_EPS)
    g1 = (jnp.einsum("nchw,cf->nfhw", g, params["wg"])
          + params["bg"][None, :, None, None]) * s
    x1 = (jnp.einsum("nchw,cf->nfhw", x, params["wx"])
          + params["bx"][None, :, None, None]) * s
    psi = jax.nn.relu(g1 + x1)
    logit = (jnp.einsum("nfhw,f->nhw", psi, params["wa"]) + params["ba"]) * s
    att = jax.nn.sigmoid(logit)[:, None, :, :]
    return x * att


# ----------------------------------------------------------------------------
if __name__ == "__main__":
    key = jax.random.PRNGKey(0)
    N, H, W = 2, 16, 16
    F_g, F_l, F_int = 32, 32, 16

    kg, kx, kp = jax.random.split(key, 3)
    g = jax.random.normal(kg, (N, F_l, H, W), jnp.float32)   # gating signal
    x = jax.random.normal(kx, (N, F_g, H, W), jnp.float32)   # skip features

    params = init_params(kp, F_g, F_l, F_int)
    folded = fold_bn(params)

    out = attention_block(g, x, folded)
    jax.block_until_ready(out)

    ref = attention_block_ref(g, x, params)
    assert out.shape == (N, F_g, H, W), out.shape
    assert bool(jnp.all(jnp.isfinite(out)))
    # Tolerance scales with the bf16-matmul channel counts.
    tol = 5e-2 * max(1.0, float(np.sqrt(F_int / 16.0)))
    max_err = float(jnp.max(jnp.abs(out - ref)))
    assert max_err < tol, f"max abs err vs f32 reference: {max_err} (tol {tol})"

    print("KERNEL_OK")
</pallas_src>

<mosaic_0001>
module attributes {stable_mosaic.version = 11 : i64} {
  func.func @_attention_block_kernel(%arg0: i32, %arg1: i32, %arg2: memref<1x32x256xf32, #tpu.memory_space<vmem>>, %arg3: memref<1x32x256xf32, #tpu.memory_space<vmem>>, %arg4: memref<16x32xbf16, #tpu.memory_space<vmem>>, %arg5: memref<16x32xbf16, #tpu.memory_space<vmem>>, %arg6: memref<16x1xf32, #tpu.memory_space<vmem>>, %arg7: memref<16x1xf32, #tpu.memory_space<vmem>>, %arg8: memref<1xf32, #tpu.memory_space<smem>>, %arg9: memref<1x32x256xf32, #tpu.memory_space<vmem>>) attributes {dimension_semantics = [#tpu.dimension_semantics<parallel>, #tpu.dimension_semantics<parallel>], iteration_bounds = array<i64: 2, 1>, scalar_prefetch = 0 : i64, scratch_operands = 0 : i64, tpu.core_type = #tpu.core_type<tc>, window_params = [{transform_indices = @transform_0, window_bounds = array<i64: 1, 32, 256>}, {transform_indices = @transform_1, window_bounds = array<i64: 1, 32, 256>}, {pipeline_mode = #tpu.pipeline_mode<synchronous>, transform_indices = @transform_2, window_bounds = array<i64: 16, 32>}, {pipeline_mode = #tpu.pipeline_mode<synchronous>, transform_indices = @transform_3, window_bounds = array<i64: 16, 32>}, {pipeline_mode = #tpu.pipeline_mode<synchronous>, transform_indices = @transform_4, window_bounds = array<i64: 16, 1>}, {pipeline_mode = #tpu.pipeline_mode<synchronous>, transform_indices = @transform_5, window_bounds = array<i64: 16, 1>}, {transform_indices = @transform_6, window_bounds = array<i64: 1>}, {transform_indices = @transform_7, window_bounds = array<i64: 1, 32, 256>}]} {
    %c0 = arith.constant 0 : index
    %c0_0 = arith.constant 0 : index
    %c0_1 = arith.constant 0 : index
    %0 = vector.load %arg3[%c0, %c0_0, %c0_1] : memref<1x32x256xf32, #tpu.memory_space<vmem>>, vector<1x32x256xf32>
    %1 = vector.shape_cast %0 : vector<1x32x256xf32> to vector<32x256xf32>
    %c0_2 = arith.constant 0 : index
    %c0_3 = arith.constant 0 : index
    %2 = vector.load %arg4[%c0_2, %c0_3] : memref<16x32xbf16, #tpu.memory_space<vmem>>, vector<16x32xbf16>
    %c0_4 = arith.constant 0 : index
    %c0_5 = arith.constant 0 : index
    %c0_6 = arith.constant 0 : index
    %3 = vector.load %arg2[%c0_4, %c0_5, %c0_6] : memref<1x32x256xf32, #tpu.memory_space<vmem>>, vector<1x32x256xf32>
    %4 = vector.shape_cast %3 : vector<1x32x256xf32> to vector<32x256xf32>
    %5 = arith.truncf %4 : vector<32x256xf32> to vector<32x256xbf16>
    %cst = arith.constant dense<0.000000e+00> : vector<16x256xf32>
    %6 = tpu.matmul %2, %5, %cst {dimension_numbers = #tpu.dot_dimension_numbers<[1], [0], [0], [1], [0, 0, 1, 1], [], []>} : vector<16x32xbf16>, vector<32x256xbf16>, vector<16x256xf32> -> vector<16x256xf32>
    %c0_7 = arith.constant 0 : index
    %c0_8 = arith.constant 0 : index
    %7 = vector.load %arg5[%c0_7, %c0_8] : memref<16x32xbf16, #tpu.memory_space<vmem>>, vector<16x32xbf16>
    %8 = arith.truncf %1 : vector<32x256xf32> to vector<32x256xbf16>
    %cst_9 = arith.constant dense<0.000000e+00> : vector<16x256xf32>
    %9 = tpu.matmul %7, %8, %cst_9 {dimension_numbers = #tpu.dot_dimension_numbers<[1], [0], [0], [1], [0, 0, 1, 1], [], []>} : vector<16x32xbf16>, vector<32x256xbf16>, vector<16x256xf32> -> vector<16x256xf32>
    %10 = arith.addf %6, %9 : vector<16x256xf32>
    %c0_10 = arith.constant 0 : index
    %c0_11 = arith.constant 0 : index
    %11 = vector.load %arg6[%c0_10, %c0_11] : memref<16x1xf32, #tpu.memory_space<vmem>>, vector<16x1xf32>
    %12 = vector.broadcast %11 : vector<16x1xf32> to vector<16x256xf32>
    %13 = arith.addf %10, %12 : vector<16x256xf32>
    %cst_12 = arith.constant 0.000000e+00 : f32
    %14 = vector.broadcast %cst_12 : f32 to vector<16x256xf32>
    %15 = arith.maximumf %13, %14 : vector<16x256xf32>
    %c0_13 = arith.constant 0 : index
    %c0_14 = arith.constant 0 : index
    %16 = vector.load %arg7[%c0_13, %c0_14] : memref<16x1xf32, #tpu.memory_space<vmem>>, vector<16x1xf32>
    %17 = vector.broadcast %16 : vector<16x1xf32> to vector<16x256xf32>
    %18 = arith.mulf %15, %17 : vector<16x256xf32>
    %cst_15 = arith.constant dense<0.000000e+00> : vector<256xf32>
    %19 = vector.multi_reduction <add>, %18, %cst_15 [0] : vector<16x256xf32> to vector<256xf32>
    %20 = vector.shape_cast %19 : vector<256xf32> to vector<1x256xf32>
    %c0_16 = arith.constant 0 : index
    %21 = memref.load %arg8[%c0_16] : memref<1xf32, #tpu.memory_space<smem>>
    %22 = vector.broadcast %21 : f32 to vector<1x256xf32>
    %23 = arith.addf %20, %22 : vector<1x256xf32>
    %24 = arith.negf %23 : vector<1x256xf32>
    %25 = math.exp %24 : vector<1x256xf32>
    %cst_17 = arith.constant 1.000000e+00 : f32
    %26 = vector.broadcast %cst_17 : f32 to vector<1x256xf32>
    %27 = arith.addf %26, %25 : vector<1x256xf32>
    %28 = arith.divf %26, %27 : vector<1x256xf32>
    %29 = vector.broadcast %28 : vector<1x256xf32> to vector<32x256xf32>
    %30 = arith.mulf %1, %29 : vector<32x256xf32>
    %c0_18 = arith.constant 0 : index
    %c0_19 = arith.constant 0 : index
    %c0_20 = arith.constant 0 : index
    %31 = vector.load %arg9[%c0_18, %c0_19, %c0_20] : memref<1x32x256xf32, #tpu.memory_space<vmem>>, vector<1x32x256xf32>
    %32 = vector.shape_cast %31 : vector<1x32x256xf32> to vector<32x256xf32>
    %33 = vector.shape_cast %30 : vector<32x256xf32> to vector<1x32x256xf32>
    tpu.vector_store %arg9[%c0_18, %c0_19, %c0_20], %33 {strides = array<i32>} : memref<1x32x256xf32, #tpu.memory_space<vmem>>, vector<1x32x256xf32>,
    return
  }
  func.func @transform_0(%arg0: i32, %arg1: i32) -> (i32, i32, i32) {
    %c0_i32 = arith.constant 0 : i32
    %c0_i32_0 = arith.constant 0 : i32
    return %arg0, %c0_i32, %arg1 : i32, i32, i32
  }
  func.func @transform_1(%arg0: i32, %arg1: i32) -> (i32, i32, i32) {
    %c0_i32 = arith.constant 0 : i32
    %c0_i32_0 = arith.constant 0 : i32
    return %arg0, %c0_i32, %arg1 : i32, i32, i32
  }
  func.func @transform_2(%arg0: i32, %arg1: i32) -> (i32, i32) {
    %c0_i32 = arith.constant 0 : i32
    %c0_i32_0 = arith.constant 0 : i32
    %c0_i32_1 = arith.constant 0 : i32
    return %c0_i32, %c0_i32_0 : i32, i32
  }
  func.func @transform_3(%arg0: i32, %arg1: i32) -> (i32, i32) {
    %c0_i32 = arith.constant 0 : i32
    %c0_i32_0 = arith.constant 0 : i32
    %c0_i32_1 = arith.constant 0 : i32
    return %c0_i32, %c0_i32_0 : i32, i32
  }
  func.func @transform_4(%arg0: i32, %arg1: i32) -> (i32, i32) {
    %c0_i32 = arith.constant 0 : i32
    %c0_i32_0 = arith.constant 0 : i32
    %c0_i32_1 = arith.constant 0 : i32
    return %c0_i32, %c0_i32_0 : i32, i32
  }
  func.func @transform_5(%arg0: i32, %arg1: i32) -> (i32, i32) {
    %c0_i32 = arith.constant 0 : i32
    %c0_i32_0 = arith.constant 0 : i32
    %c0_i32_1 = arith.constant 0 : i32
    return %c0_i32, %c0_i32_0 : i32, i32
  }
  func.func @transform_6(%arg0: i32, %arg1: i32) -> i32 {
    %c0_i32 = arith.constant 0 : i32
    %c0_i32_0 = arith.constant 0 : i32
    return %c0_i32 : i32
  }
  func.func @transform_7(%arg0: i32, %arg1: i32) -> (i32, i32, i32) {
    %c0_i32 = arith.constant 0 : i32
    %c0_i32_0 = arith.constant 0 : i32
    return %arg0, %c0_i32, %arg1 : i32, i32, i32
  }
}

</mosaic_0001>

<llo_original>
// kernel: attention_block.1
$region0: #{attention_block.1}
  #allocation0 [shape = 'u32[]', space=smem, size = 0x4, offset = 0x4, fixed_abs, tag = 'smem constant byte address 0x4 - core index']
  #allocation1 [shape = 'u32[144,128]{1,0:T(1,128)}', space=vmem, size = 0x12000, scoped, tag = 'internal scratch']
  #allocation2 [shape = 'f32[1]{0:T(128)S(6)}', space=smem, size = 0x200, scoped, tag = 'scoped memory for attention_block.1']
  %s0 = inlined_call_operand.vmem [shape: f32[2,32,256], index: 0, kind: input, shape index: {}]
  %s1 = inlined_call_operand.vmem [shape: f32[2,32,256], index: 1, kind: input, shape index: {}]
  %s2 = inlined_call_operand.vmem [shape: bf16[16,32], index: 2, kind: input, shape index: {}]
  %s3 = inlined_call_operand.vmem [shape: bf16[16,32], index: 3, kind: input, shape index: {}]
  %s4 = inlined_call_operand.vmem [shape: f32[16,1], index: 4, kind: input, shape index: {}]
  %s5 = inlined_call_operand.vmem [shape: f32[16,1], index: 5, kind: input, shape index: {}]
  %s6 = inlined_call_operand.<no memory space> [shape: f32[1], index: 6, kind: input, shape index: {}]
  %s7 = inlined_call_operand.vmem [shape: f32[2,32,256], index: 7, kind: output, shape index: {}]
  %s8 = sld [smem:[#allocation0]]
  $region61: #{attention_block.1} parent=0
    _
  %s10 = ssub.s32 1, %s8
  %s11 = scalar_select 0, %s10, %s8
  %12 = sst [smem:[#allocation2]] %s6
  loop: start=0, step=1, limit=4
  $region2: #{attention_block.1} parent=0 // loop_pre_header
    _
  $region3: #{attention_block.1} parent=0 // loop_header
    %s14 = sphi 0, %s18
    %p15 = scmp.ge.s32.totalorder %s14, 4
    %s21 = sphi 0, %s33
    %s22 = sphi 0, %s29
    %s23 = sphi 0, %s21
    %s24 = sphi 0, %s22
    %s25 = sphi 0, %s23
    %s26 = sphi 0, %s24
    %s38 = sphi 0, %s40
    %s41 = sphi 0, %s38
    %s42 = sphi 0, %s41
    %s58 = sphi 0, %s42
    %s66 = sphi 0, %s68
    %s69 = sphi 0, %s66
    %s70 = sphi 0, %s69
    %s86 = sphi 0, %s70
    %s90 = sphi 0, %s90
    %s92 = sphi 0, %s90
    %s93 = sphi 0, %s92
    %s107 = sphi 0, %s93
    %s111 = sphi 0, %s111
    %s113 = sphi 0, %s111
    %s114 = sphi 0, %s113
    %s128 = sphi 0, %s114
    %s132 = sphi 0, %s132
    %s134 = sphi 0, %s132
    %s135 = sphi 0, %s134
    %s149 = sphi 0, %s135
    %s153 = sphi 0, %s153
    %s155 = sphi 0, %s153
    %s156 = sphi 0, %s155
    %s170 = sphi 0, %s156
    %s174 = sphi 0, %s174
    %s176 = sphi 0, %s174
    %s177 = sphi 0, %s176
    %s191 = sphi 0, %s177
    %s199 = sphi 0, %s201
    %s202 = sphi 0, %s199
    %s203 = sphi 0, %s202
    %s219 = sphi 0, %s203
  $region4: #{attention_block.1} parent=0 // loop_header_branch
    %17 = sbr.rel (%p15) target = $region8
  $region5: #{attention_block.1} parent=0 // loop_body
    %s19 = ssub.s32 %s14, 1
    %s20 = ssub.s32 %s14, 2
    %s27 = sadd.s32 1, %s22
    %p28 = scmp.ge.s32.totalorder %s27, 1
    %s29 = scalar_select %p28, 0, %s27
    %s30 = sadd.s32 1, %s21
    %s31 = scalar_select %p28, %s30, %s21
    %p32 = scmp.ge.s32.totalorder %s31, 2
    %s33 = scalar_select %p32, 0, %s31
    %s34 = ssub.s32 %s21, %s33
    %s35 = ssub.s32 %s22, %s29
    %s36 = sor.u32 %s34, %s35
    %p37 = scmp.eq.s32.totalorder %s36, 0
    %s39 = sadd.s32 %s38, 1
    %s40 = scalar_select %p37, %s38, %s39
    %p43 = pneg %p37
    %p44 = scmp.eq.s32.totalorder %s14, 1
    %p45 = por %p43, %p44
    %p46 = scmp.ne.s32.totalorder %s38, %s41
    %p47 = scmp.eq.s32.totalorder %s14, 0
    %p48 = por %p46, %p47
    %p49 = scmp.ne.s32.totalorder %s38, %s41
    %p50 = scmp.eq.s32.totalorder %s19, 1
    %p51 = por %p49, %p50
    %p52 = scmp.ne.s32.totalorder %s41, %s42
    %p53 = scmp.eq.s32.totalorder %s19, 0
    %p54 = por %p52, %p53
    %p55 = scmp.ne.s32.totalorder %s41, %s42
    %p56 = scmp.eq.s32.totalorder %s20, 1
    %p57 = por %p55, %p56
    %p59 = scmp.ne.s32.totalorder %s42, %s58
    %p60 = scmp.eq.s32.totalorder %s20, 0
    %p61 = por %p59, %p60
    %s62 = ssub.s32 %s21, %s33
    %s63 = ssub.s32 %s22, %s29
    %s64 = sor.u32 %s62, %s63
    %p65 = scmp.eq.s32.totalorder %s64, 0
    %s67 = sadd.s32 %s66, 1
    %s68 = scalar_select %p65, %s66, %s67
    %p71 = pneg %p65
    %p72 = scmp.eq.s32.totalorder %s14, 1
    %p73 = por %p71, %p72
    %p74 = scmp.ne.s32.totalorder %s66, %s69
    %p75 = scmp.eq.s32.totalorder %s14, 0
    %p76 = por %p74, %p75
    %p77 = scmp.ne.s32.totalorder %s66, %s69
    %p78 = scmp.eq.s32.totalorder %s19, 1
    %p79 = por %p77, %p78
    %p80 = scmp.ne.s32.totalorder %s69, %s70
    %p81 = scmp.eq.s32.totalorder %s19, 0
    %p82 = por %p80, %p81
    %p83 = scmp.ne.s32.totalorder %s69, %s70
    %p84 = scmp.eq.s32.totalorder %s20, 1
    %p85 = por %p83, %p84
    %p87 = scmp.ne.s32.totalorder %s70, %s86
    %p88 = scmp.eq.s32.totalorder %s20, 0
    %p89 = por %p87, %p88
    %s91 = sadd.s32 %s90, 1
    %p94 = scmp.eq.s32.totalorder %s14, 1
    %p95 = scmp.ne.s32.totalorder %s90, %s92
    %p96 = scmp.eq.s32.totalorder %s14, 0
    %p97 = por %p95, %p96
    %p98 = scmp.ne.s32.totalorder %s90, %s92
    %p99 = scmp.eq.s32.totalorder %s19, 1
    %p100 = por %p98, %p99
    %p101 = scmp.ne.s32.totalorder %s92, %s93
    %p102 = scmp.eq.s32.totalorder %s19, 0
    %p103 = por %p101, %p102
    %p104 = scmp.ne.s32.totalorder %s92, %s93
    %p105 = scmp.eq.s32.totalorder %s20, 1
    %p106 = por %p104, %p105
    %p108 = scmp.ne.s32.totalorder %s93, %s107
    %p109 = scmp.eq.s32.totalorder %s20, 0
    %p110 = por %p108, %p109
    %s112 = sadd.s32 %s111, 1
    %p115 = scmp.eq.s32.totalorder %s14, 1
    %p116 = scmp.ne.s32.totalorder %s111, %s113
    %p117 = scmp.eq.s32.totalorder %s14, 0
    %p118 = por %p116, %p117
    %p119 = scmp.ne.s32.totalorder %s111, %s113
    %p120 = scmp.eq.s32.totalorder %s19, 1
    %p121 = por %p119, %p120
    %p122 = scmp.ne.s32.totalorder %s113, %s114
    %p123 = scmp.eq.s32.totalorder %s19, 0
    %p124 = por %p122, %p123
    %p125 = scmp.ne.s32.totalorder %s113, %s114
    %p126 = scmp.eq.s32.totalorder %s20, 1
    %p127 = por %p125, %p126
    %p129 = scmp.ne.s32.totalorder %s114, %s128
    %p130 = scmp.eq.s32.totalorder %s20, 0
    %p131 = por %p129, %p130
    %s133 = sadd.s32 %s132, 1
    %p136 = scmp.eq.s32.totalorder %s14, 1
    %p137 = scmp.ne.s32.totalorder %s132, %s134
    %p138 = scmp.eq.s32.totalorder %s14, 0
    %p139 = por %p137, %p138
    %p140 = scmp.ne.s32.totalorder %s132, %s134
    %p141 = scmp.eq.s32.totalorder %s19, 1
    %p142 = por %p140, %p141
    %p143 = scmp.ne.s32.totalorder %s134, %s135
    %p144 = scmp.eq.s32.totalorder %s19, 0
    %p145 = por %p143, %p144
    %p146 = scmp.ne.s32.totalorder %s134, %s135
    %p147 = scmp.eq.s32.totalorder %s20, 1
    %p148 = por %p146, %p147
    %p150 = scmp.ne.s32.totalorder %s135, %s149
    %p151 = scmp.eq.s32.totalorder %s20, 0
    %p152 = por %p150, %p151
    %s154 = sadd.s32 %s153, 1
    %p157 = scmp.eq.s32.totalorder %s14, 1
    %p158 = scmp.ne.s32.totalorder %s153, %s155
    %p159 = scmp.eq.s32.totalorder %s14, 0
    %p160 = por %p158, %p159
    %p161 = scmp.ne.s32.totalorder %s153, %s155
    %p162 = scmp.eq.s32.totalorder %s19, 1
    %p163 = por %p161, %p162
    %p164 = scmp.ne.s32.totalorder %s155, %s156
    %p165 = scmp.eq.s32.totalorder %s19, 0
    %p166 = por %p164, %p165
    %p167 = scmp.ne.s32.totalorder %s155, %s156
    %p168 = scmp.eq.s32.totalorder %s20, 1
    %p169 = por %p167, %p168
    %p171 = scmp.ne.s32.totalorder %s156, %s170
    %p172 = scmp.eq.s32.totalorder %s20, 0
    %p173 = por %p171, %p172
    %s175 = sadd.s32 %s174, 1
    %p178 = scmp.eq.s32.totalorder %s14, 1
    %p179 = scmp.ne.s32.totalorder %s174, %s176
    %p180 = scmp.eq.s32.totalorder %s14, 0
    %p181 = por %p179, %p180
    %p182 = scmp.ne.s32.totalorder %s174, %s176
    %p183 = scmp.eq.s32.totalorder %s19, 1
    %p184 = por %p182, %p183
    %p185 = scmp.ne.s32.totalorder %s176, %s177
    %p186 = scmp.eq.s32.totalorder %s19, 0
    %p187 = por %p185, %p186
    %p188 = scmp.ne.s32.totalorder %s176, %s177
    %p189 = scmp.eq.s32.totalorder %s20, 1
    %p190 = por %p188, %p189
    %p192 = scmp.ne.s32.totalorder %s177, %s191
    %p193 = scmp.eq.s32.totalorder %s20, 0
    %p194 = por %p192, %p193
    %s195 = ssub.s32 %s21, %s33
    %s196 = ssub.s32 %s22, %s29
    %s197 = sor.u32 %s195, %s196
    %p198 = scmp.eq.s32.totalorder %s197, 0
    %s200 = sadd.s32 %s199, 1
    %s201 = scalar_select %p198, %s199, %s200
    %p204 = pneg %p198
    %p205 = scmp.eq.s32.totalorder %s14, 1
    %p206 = por %p204, %p205
    %p207 = scmp.ne.s32.totalorder %s199, %s202
    %p208 = scmp.eq.s32.totalorder %s14, 0
    %p209 = por %p207, %p208
    %p210 = scmp.ne.s32.totalorder %s199, %s202
    %p211 = scmp.eq.s32.totalorder %s19, 1
    %p212 = por %p210, %p211
    %p213 = scmp.ne.s32.totalorder %s202, %s203
    %p214 = scmp.eq.s32.totalorder %s19, 0
    %p215 = por %p213, %p214
    %p216 = scmp.ne.s32.totalorder %s202, %s203
    %p217 = scmp.eq.s32.totalorder %s20, 1
    %p218 = por %p216, %p217
    %p220 = scmp.ne.s32.totalorder %s203, %s219
    %p221 = scmp.eq.s32.totalorder %s20, 0
    %p222 = por %p220, %p221
    %p223 = scmp.le.s32.totalorder 1, %s14
    %p224 = scmp.lt.s32.totalorder %s14, 3
    %p225 = pnand %p223, %p224
    %p226 = pneg %p225
    // Predicated region
    $region9: #{attention_block.1} parent=5 // pred_check
      _
    $region10: #{attention_block.1} parent=5 // pred_check_branch
      %228 = sbr.rel (%p225) target = $region12
    $region11: #{attention_block.1} parent=5 // pred_region
      %s229 = ssub.s32 %s14, 1
      // Predicated region
      $region13: #{attention_block.1} parent=11 // pred_check
        %p230 = pneg %p103
      $region14: #{attention_block.1} parent=11 // pred_check_branch
        %232 = sbr.rel (%p230) target = $region16
      $region15: #{attention_block.1} parent=11 // pred_region
        _
      $region16: #{attention_block.1} parent=11 // pred_fallthru
        _
      // Predicated region
      $region17: #{attention_block.1} parent=11 // pred_check
        %p233 = pneg %p124
      $region18: #{attention_block.1} parent=11 // pred_check_branch
        %235 = sbr.rel (%p233) target = $region20
      $region19: #{attention_block.1} parent=11 // pred_region
        _
      $region20: #{attention_block.1} parent=11 // pred_fallthru
        _
      // Predicated region
      $region21: #{attention_block.1} parent=11 // pred_check
        %p236 = pneg %p145
      $region22: #{attention_block.1} parent=11 // pred_check_branch
        %238 = sbr.rel (%p236) target = $region24
      $region23: #{attention_block.1} parent=11 // pred_region
        _
      $region24: #{attention_block.1} parent=11 // pred_fallthru
        _
      // Predicated region
      $region25: #{attention_block.1} parent=11 // pred_check
        %p239 = pneg %p166
      $region26: #{attention_block.1} parent=11 // pred_check_branch
        %241 = sbr.rel (%p239) target = $region28
      $region27: #{attention_block.1} parent=11 // pred_region
        _
      $region28: #{attention_block.1} parent=11 // pred_fallthru
        _
      // Predicated region
      $region29: #{attention_block.1} parent=11 // pred_check
        %p242 = pneg %p187
      $region30: #{attention_block.1} parent=11 // pred_check_branch
        %244 = sbr.rel (%p242) target = $region32
      $region31: #{attention_block.1} parent=11 // pred_region
        _
      $region32: #{attention_block.1} parent=11 // pred_fallthru
        _
    $region12: #{attention_block.1} parent=5 // pred_fallthru
      _
    %p245 = scmp.lt.s32.totalorder %s14, 2
    // Predicated region
    $region33: #{attention_block.1} parent=5 // pred_check
      %p246 = pneg %p245
    $region34: #{attention_block.1} parent=5 // pred_check_branch
      %248 = sbr.rel (%p246) target = $region36
    $region35: #{attention_block.1} parent=5 // pred_region
      // Predicated region
      $region37: #{attention_block.1} parent=35 // pred_check
        %p249 = pneg %p48
      $region38: #{attention_block.1} parent=35 // pred_check_branch
        %251 = sbr.rel (%p249) target = $region40
      $region39: #{attention_block.1} parent=35 // pred_region
        %s252 = smul.u32 2, %s22
        %p253 = scmp.lt.s32.totalorder %s21, 1
        %s254 = scalar_select %p253, %s21, 1
        %p255 = scmp.lt.s32.totalorder %s252, 1
        %s256 = scalar_select %p255, %s252, 1
        %s257 = smul.addr %s254, 8
        %s258 = sadd.s32 %s256, %s257
        %s259 = smul.addr %s258, 8
        %s260 = scalar_lea.vmem %s0, %s259
        %s261 = smul.u32 2, %s22
      $region40: #{attention_block.1} parent=35 // pred_fallthru
        _
      // Predicated region
      $region41: #{attention_block.1} parent=35 // pred_check
        %p262 = pneg %p76
      $region42: #{attention_block.1} parent=35 // pred_check_branch
        %264 = sbr.rel (%p262) target = $region44
      $region43: #{attention_block.1} parent=35 // pred_region
        %s265 = smul.u32 2, %s22
        %p266 = scmp.lt.s32.totalorder %s21, 1
        %s267 = scalar_select %p266, %s21, 1
        %p268 = scmp.lt.s32.totalorder %s265, 1
        %s269 = scalar_select %p268, %s265, 1
        %s270 = smul.addr %s267, 8
        %s271 = sadd.s32 %s269, %s270
        %s272 = smul.addr %s271, 8
        %s273 = scalar_lea.vmem %s1, %s272
        %s274 = smul.u32 2, %s22
      $region44: #{attention_block.1} parent=35 // pred_fallthru
        _
    $region36: #{attention_block.1} parent=5 // pred_fallthru
      _
    %p275 = scmp.le.s32.totalorder 1, %s14
    %p276 = scmp.lt.s32.totalorder %s14, 3
    %p277 = pnand %p275, %p276
    %p278 = pneg %p277
    // Predicated region
    $region45: #{attention_block.1} parent=5 // pred_check
      _
    $region46: #{attention_block.1} parent=5 // pred_check_branch
      %280 = sbr.rel (%p277) target = $region48
    $region47: #{attention_block.1} parent=5 // pred_region
      %s281 = ssub.s32 %s14, 1
      %s282 = smul.u32 2, %s24
      %p283 = scmp.lt.s32.totalorder %s23, 1
      %s284 = scalar_select %p283, %s23, 1
      %p285 = scmp.lt.s32.totalorder %s282, 1
      %s286 = scalar_select %p285, %s282, 1
      %s287 = smul.addr %s284, 8
      %s288 = sadd.s32 %s286, %s287
      %s289 = smul.addr %s288, 8
      %s290 = scalar_lea.vmem %s0, %s289
      %p291 = pneg %p54
      %p292 = pneg %p51
      %s293 = smul.u32 2, %s24
      %p294 = scmp.lt.s32.totalorder %s23, 1
      %s295 = scalar_select %p294, %s23, 1
      %p296 = scmp.lt.s32.totalorder %s293, 1
      %s297 = scalar_select %p296, %s293, 1
      %s298 = smul.addr %s295, 8
      %s299 = sadd.s32 %s297, %s298
      %s300 = smul.addr %s299, 8
      %s301 = scalar_lea.vmem %s1, %s300
      %p302 = pneg %p82
      %p303 = pneg %p79
      %p304 = pneg %p103
      %p305 = pneg %p100
      %p306 = pneg %p124
      %p307 = pneg %p121
      %p308 = pneg %p145
      %p309 = pneg %p142
      %p310 = pneg %p166
      %p311 = pneg %p163
      %p312 = pneg %p187
      %p313 = pneg %p184
      %p314 = pneg %p215
      %p315 = pneg %p212
      %s316 = smul.u32 2, %s24
      %p317 = scmp.lt.s32.totalorder %s23, 1
      %s318 = scalar_select %p317, %s23, 1
      %p319 = scmp.lt.s32.totalorder %s316, 1
      %s320 = scalar_select %p319, %s316, 1
      %s321 = smul.addr %s318, 8
      %s322 = sadd.s32 %s320, %s321
      %s323 = smul.addr %s322, 8
      %s324 = scalar_lea.vmem %s7, %s323
      %s325 = smul.u32 2, %s24
      %p326 = scmp.lt.s32.totalorder %s23, 1
      %s327 = scalar_select %p326, %s23, 1
      %p328 = scmp.lt.s32.totalorder %s325, 1
      %s329 = scalar_select %p328, %s325, 1
      %s330 = smul.addr %s327, 8
      %s331 = sadd.s32 %s329, %s330
      %s332 = smul.addr %s331, 8
      %s333 = scalar_lea.vmem %s0, %s332
      %s334 = smul.u32 2, %s24
      %s335 = smul.u32 2, %s24
      %p336 = scmp.lt.s32.totalorder %s23, 1
      %s337 = scalar_select %p336, %s23, 1
      %p338 = scmp.lt.s32.totalorder %s335, 1
      %s339 = scalar_select %p338, %s335, 1
      %s340 = smul.addr %s337, 8
      %s341 = sadd.s32 %s339, %s340
      %s342 = smul.addr %s341, 8
      %s343 = scalar_lea.vmem %s1, %s342
      %s344 = smul.u32 2, %s24
      %s345 = smul.u32 2, %s24
      %p346 = scmp.lt.s32.totalorder %s23, 1
      %s347 = scalar_select %p346, %s23, 1
      %p348 = scmp.lt.s32.totalorder %s345, 1
      %s349 = scalar_select %p348, %s345, 1
      %s350 = smul.addr %s347, 8
      %s351 = sadd.s32 %s349, %s350
      %s352 = smul.addr %s351, 8
      %s353 = scalar_lea.vmem %s7, %s352
      %s354 = smul.u32 2, %s24
      %v356 = vld [vmem:[%s343] sm:$0xff]
      %v357 = vld [vmem:[%s343 + $0x8] sm:$0xff]
      %v358 = vld [vmem:[%s343 + $0x10] sm:$0xff]
      %v359 = vld [vmem:[%s343 + $0x18] sm:$0xff]
      %v360 = vld [vmem:[%s343 + $0x20] sm:$0xff]
      %v361 = vld [vmem:[%s343 + $0x28] sm:$0xff]
      %v362 = vld [vmem:[%s343 + $0x30] sm:$0xff]
      %v363 = vld [vmem:[%s343 + $0x38] sm:$0xff]
      %v364 = vld [vmem:[%s2] sm:$0xf]
      %v365 = vld [vmem:[%s2 + $0x4] sm:$0xf]
      %v366 = vld [vmem:[%s333] sm:$0xff]
      %v367 = vld [vmem:[%s333 + $0x8] sm:$0xff]
      %v368 = vld [vmem:[%s333 + $0x10] sm:$0xff]
      %v369 = vld [vmem:[%s333 + $0x18] sm:$0xff]
      %v370 = vld [vmem:[%s333 + $0x20] sm:$0xff]
      %v371 = vld [vmem:[%s333 + $0x28] sm:$0xff]
      %v372 = vld [vmem:[%s333 + $0x30] sm:$0xff]
      %v373 = vld [vmem:[%s333 + $0x38] sm:$0xff]
      %v374 = vpack.c.bf16 %v368, %v366
      %v375 = vpack.c.bf16 %v369, %v367
      %v376 = vpack.c.bf16 %v372, %v370
      %v377 = vpack.c.bf16 %v373, %v371
      %v378 = vld [vmem:[%s3] sm:$0xf]
      %v379 = vld [vmem:[%s3 + $0x4] sm:$0xf]
      %v380 = vpack.c.bf16 %v358, %v356
      %v381 = vpack.c.bf16 %v359, %v357
      %v382 = vpack.c.bf16 %v362, %v360
      %v383 = vpack.c.bf16 %v363, %v361
      %v386 = vunpack.c.l.b16 %v378
      %v387 = vunpack.c.l.b16 %v379
      %v388 = vpack.c.b16 %v387, %v386
      %vm389 = vcmask 261120
      %v391 = vsel %vm389, %v388, 0
      %393 = vmatprep.subr.bf16.mxu0 %v381
      %394 = vmatpush1.bf16.msra.mxu0 %v380
      %395 = vmatprep.subr.bf16.mxu0 %v383
      %396 = vmatpush1.bf16.msra.mxu0 %v382
      %397 = vmatprep.subr.bf16.mxu0 0
      %398 = vmatpush1.bf16.msra.mxu0 0
      %399 = vmatprep.subr.bf16.mxu0 0
      %400 = vmatpush1.bf16.msra.mxu0 0
      %401 = vmatprep.subr.bf16.mxu0 0
      %402 = vmatpush1.bf16.msra.mxu0 0
      %403 = vmatprep.subr.bf16.mxu0 0
      %404 = vmatpush1.bf16.msra.mxu0 0
      %405 = vmatprep.subr.bf16.mxu0 0
      %406 = vmatpush1.bf16.msra.mxu0 0
      %407 = vmatprep.subr.bf16.mxu0 0
      %408 = vmatpush1.bf16.msra.mxu0 0
      %409 = vmatprep.subr.bf16.mxu0 0
      %410 = vmatpush1.bf16.msra.mxu0 0
      %411 = vmatprep.subr.bf16.mxu0 0
      %412 = vmatpush1.bf16.msra.mxu0 0
      %413 = vmatprep.subr.bf16.mxu0 0
      %414 = vmatpush1.bf16.msra.mxu0 0
      %415 = vmatprep.subr.bf16.mxu0 0
      %416 = vmatpush1.bf16.msra.mxu0 0
      %417 = vmatprep.subr.bf16.mxu0 0
      %418 = vmatpush1.bf16.msra.mxu0 0
      %419 = vmatprep.subr.bf16.mxu0 0
      %420 = vmatpush1.bf16.msra.mxu0 0
      %421 = vmatprep.subr.bf16.mxu0 0
      %422 = vmatpush1.bf16.msra.mxu0 0
      %423 = vmatprep.subr.bf16.mxu0 0
      %424 = vmatpush1.bf16.msra.mxu0 0
      %425 = vmatprep.mubr.bf16.mxu0 0
      %426 = vmatmul.mubr.bf16.gmra.mrb[0].mxu0 %v391
      %v427 = vpop.f32.mrb[0].mxu0
      %v428 = vadd.f32 0.0, %v427
      %v429 = vpop.f32.mrb[0].mxu0
      %v430 = vadd.f32 0.0, %v429
      %v431 = vpop.f32.mrb[0].mxu0
      %v432 = vadd.f32 0.0, %v431
      %v433 = vpop.f32.mrb[0].mxu0
      %v434 = vadd.f32 0.0, %v433
      %435 = vdwg.mxu0
      %v438 = vunpack.c.l.b16 %v364
      %v439 = vunpack.c.l.b16 %v365
      %v440 = vpack.c.b16 %v439, %v438
      %v442 = vsel %vm389, %v440, 0
      %444 = vmatprep.subr.bf16.mxu0 %v375
      %445 = vmatpush1.bf16.msra.mxu0 %v374
      %446 = vmatprep.subr.bf16.mxu0 %v377
      %447 = vmatpush1.bf16.msra.mxu0 %v376
      %448 = vmatprep.subr.bf16.mxu0 0
      %449 = vmatpush1.bf16.msra.mxu0 0
      %450 = vmatprep.subr.bf16.mxu0 0
      %451 = vmatpush1.bf16.msra.mxu0 0
      %452 = vmatprep.subr.bf16.mxu0 0
      %453 = vmatpush1.bf16.msra.mxu0 0
      %454 = vmatprep.subr.bf16.mxu0 0
      %455 = vmatpush1.bf16.msra.mxu0 0
      %456 = vmatprep.subr.bf16.mxu0 0
      %457 = vmatpush1.bf16.msra.mxu0 0
      %458 = vmatprep.subr.bf16.mxu0 0
      %459 = vmatpush1.bf16.msra.mxu0 0
      %460 = vmatprep.subr.bf16.mxu0 0
      %461 = vmatpush1.bf16.msra.mxu0 0
      %462 = vmatprep.subr.bf16.mxu0 0
      %463 = vmatpush1.bf16.msra.mxu0 0
      %464 = vmatprep.subr.bf16.mxu0 0
      %465 = vmatpush1.bf16.msra.mxu0 0
      %466 = vmatprep.subr.bf16.mxu0 0
      %467 = vmatpush1.bf16.msra.mxu0 0
      %468 = vmatprep.subr.bf16.mxu0 0
      %469 = vmatpush1.bf16.msra.mxu0 0
      %470 = vmatprep.subr.bf16.mxu0 0
      %471 = vmatpush1.bf16.msra.mxu0 0
      %472 = vmatprep.subr.bf16.mxu0 0
      %473 = vmatpush1.bf16.msra.mxu0 0
      %474 = vmatprep.subr.bf16.mxu0 0
      %475 = vmatpush1.bf16.msra.mxu0 0
      %476 = vmatprep.mubr.bf16.mxu0 0
      %477 = vmatmul.mubr.bf16.gmra.mrb[0].mxu0 %v442
      %v478 = vpop.f32.mrb[0].mxu0
      %v479 = vadd.f32 %v428, %v478
      %v480 = vpop.f32.mrb[0].mxu0
      %v481 = vadd.f32 %v430, %v480
      %v482 = vpop.f32.mrb[0].mxu0
      %v483 = vadd.f32 %v432, %v482
      %v484 = vpop.f32.mrb[0].mxu0
      %v485 = vadd.f32 %v434, %v484
      %486 = vdwg.mxu0
      %v487 = vld [vmem:[%s4] sm:$0xff]
      %v488 = vld [vmem:[%s4 + $0x8] sm:$0xff]
      %490 = vset.pattern.permute.xlu0 0
      %491 = vperm.xlu0 %490, %v487
      %v492 = vpop.permute.xlu0 %491
      %495 = vset.pattern.permute.xlu0 0
      %496 = vperm.xlu0 %495, %v488
      %v497 = vpop.permute.xlu0 %496
      %v499 = vadd.f32 %v479, %v492
      %v500 = vadd.f32 %v481, %v492
      %v501 = vadd.f32 %v483, %v497
      %v502 = vadd.f32 %v485, %v497
      %v503 = vmax.f32 %v499, 0.0
      %v504 = vmax.f32 %v500, 0.0
      %v505 = vmax.f32 %v501, 0.0
      %v506 = vmax.f32 %v502, 0.0
      %v507 = vld [vmem:[%s5] sm:$0xff]
      %v508 = vld [vmem:[%s5 + $0x8] sm:$0xff]
      %510 = vset.pattern.permute.xlu0 0
      %511 = vperm.xlu0 %510, %v507
      %v512 = vpop.permute.xlu0 %511
      %515 = vset.pattern.permute.xlu0 0
      %516 = vperm.xlu0 %515, %v508
      %v517 = vpop.permute.xlu0 %516
      %v519 = vmul.f32 %v503, %v512
      %v520 = vmul.f32 %v504, %v512
      %v521 = vmul.f32 %v505, %v517
      %v522 = vmul.f32 %v506, %v517
      %v523 = vadd.f32 %v519, %v521
      %v524 = vrot.slane %v523, 4
      %v525 = vadd.f32 %v523, %v524
      %v526 = vrot.slane %v525, 2
      %v527 = vadd.f32 %v525, %v526
      %v528 = vrot.slane %v527, 1
      %v529 = vadd.f32 %v527, %v528
      %v530 = vadd.f32 %v520, %v522
      %v531 = vrot.slane %v530, 4
      %v532 = vadd.f32 %v530, %v531
      %v533 = vrot.slane %v532, 2
      %v534 = vadd.f32 %v532, %v533
      %v535 = vrot.slane %v534, 1
      %v536 = vadd.f32 %v534, %v535
      %s537 = sld [smem:[#allocation2]]
      %v538 = vstv %s537
      %v539 = vadd.f32 %v529, %v538
      %v540 = vadd.f32 %v536, %v538
      %v541 = vxor.u32 %v539, 2147483648
      %v542 = vxor.u32 %v540, 2147483648
      %v543 = vmul.f32 %v541, 1.442695
      %v544 = vpow.pop %v543
      %v545 = vmul.f32 %v542, 1.442695
      %v546 = vpow.pop %v545
      %v547 = vadd.f32 %v544, 1.0
      %v548 = vadd.f32 %v546, 1.0
      %v549 = vrcp.pop %v547
      %v550 = vmul.f32 1.0, %v549
      %v551 = vrcp.pop %v548
      %v552 = vmul.f32 1.0, %v551
      %v553 = vmul.f32 %v356, %v550
      %v554 = vmul.f32 %v357, %v552
      %v555 = vmul.f32 %v358, %v550
      %v556 = vmul.f32 %v359, %v552
      %v557 = vmul.f32 %v360, %v550
      %v558 = vmul.f32 %v361, %v552
      %v559 = vmul.f32 %v362, %v550
      %v560 = vmul.f32 %v363, %v552
      %561 = vst [vmem:[%s353] sm:$0xff] %v553
      %562 = vst [vmem:[%s353 + $0x8] sm:$0xff] %v554
      %563 = vst [vmem:[%s353 + $0x10] sm:$0xff] %v555
      %564 = vst [vmem:[%s353 + $0x18] sm:$0xff] %v556
      %565 = vst [vmem:[%s353 + $0x20] sm:$0xff] %v557
      %566 = vst [vmem:[%s353 + $0x28] sm:$0xff] %v558
      %567 = vst [vmem:[%s353 + $0x30] sm:$0xff] %v559
      %568 = vst [vmem:[%s353 + $0x38] sm:$0xff] %v560
      %s569 = smul.u32 2, %s24
      %p570 = scmp.lt.s32.totalorder %s23, 1
      %s571 = scalar_select %p570, %s23, 1
      %p572 = scmp.lt.s32.totalorder %s569, 1
      %s573 = scalar_select %p572, %s569, 1
      %s574 = smul.addr %s571, 8
      %s575 = sadd.s32 %s573, %s574
      %s576 = smul.addr %s575, 8
      %s577 = scalar_lea.vmem %s7, %s576
      // Predicated region
      $region49: #{attention_block.1} parent=47 // pred_check
        %p578 = pneg %p212
      $region50: #{attention_block.1} parent=47 // pred_check_branch
        %580 = sbr.rel (%p578) target = $region52
      $region51: #{attention_block.1} parent=47 // pred_region
        %s581 = smul.u32 2, %s24
      $region52: #{attention_block.1} parent=47 // pred_fallthru
        _
    $region48: #{attention_block.1} parent=5 // pred_fallthru
      _
    %p582 = scmp.le.s32.totalorder 2, %s14
    // Predicated region
    $region53: #{attention_block.1} parent=5 // pred_check
      %p583 = pneg %p582
    $region54: #{attention_block.1} parent=5 // pred_check_branch
      %585 = sbr.rel (%p583) target = $region56
    $region55: #{attention_block.1} parent=5 // pred_region
      %s586 = ssub.s32 %s14, 2
      // Predicated region
      $region57: #{attention_block.1} parent=55 // pred_check
        %p587 = pneg %p218
      $region58: #{attention_block.1} parent=55 // pred_check_branch
        %589 = sbr.rel (%p587) target = $region60
      $region59: #{attention_block.1} parent=55 // pred_region
        %s590 = smul.u32 2, %s26
        %p591 = scmp.lt.s32.totalorder %s25, 1
        %s592 = scalar_select %p591, %s25, 1
        %p593 = scmp.lt.s32.totalorder %s590, 1
        %s594 = scalar_select %p593, %s590, 1
        %s595 = smul.addr %s592, 8
        %s596 = sadd.s32 %s594, %s595
        %s597 = smul.addr %s596, 8
        %s598 = scalar_lea.vmem %s7, %s597
      $region60: #{attention_block.1} parent=55 // pred_fallthru
        _
    $region56: #{attention_block.1} parent=5 // pred_fallthru
      _
  $region6: #{attention_block.1} parent=0 // loop_footer
    %s18 = sadd.s32 1, %s14
  $region7: #{attention_block.1} parent=0 // loop_footer_branch
    %13 = sbr.rel target = $region3
  $region8: #{attention_block.1} parent=0 // loop_exit
    _

</llo_original>
